<compile_context>
chip_gen: v7x
topology: tpu7x:2x2x1
jax: 0.10.0
libtpu: 0.0.40
codegen_flags: <defaults>
</compile_context>

<pallas_src>
import functools

import jax
import jax.numpy as jnp
from jax import lax
from jax.experimental import pallas as pl
from jax.experimental.pallas import tpu as pltpu

_LANES = 128


def _round_up(x, m):
    return (x + m - 1) // m * m


def _mae_kernel(a_ref, b_ref, o_ref, acc_ref, *, tile_rows, lanes, rows_valid,
                tiles_per_core, chunk_rows, unroll):
    """Accumulate sum(|a-b|) for this core's row range; emit one f32 per core."""
    c = pl.program_id(0)          # per-core ("parallel") axis
    i = pl.program_id(1)          # sequential reduction axis
    n_i = pl.num_programs(1)

    @pl.when(i == 0)
    def _():
        acc_ref[...] = jnp.zeros_like(acc_ref)

    # Logical (UNCLAMPED) first row of this tile.  Drives both the
    # boundary-tile detection and the mask that zeroes (a) garbage rows of the
    # partial last tile and (b) the clamped duplicate tile on the second core.
    row0 = (c * tiles_per_core + i) * tile_rows

    n_chunks = tile_rows // chunk_rows
    u = min(unroll, n_chunks)
    while n_chunks % u:           # keep unroll an exact divisor of the trip count
        u -= 1

    def fold(masked):
        # Chunked accumulation bounds vreg live ranges (64-vreg file) and
        # avoids materializing/spilling a tile-sized |a-b| intermediate.
        def chunk_sum(j):
            r = pl.multiple_of(j * chunk_rows, chunk_rows)
            a = a_ref[pl.ds(r, chunk_rows), :].astype(jnp.float32)
            b = b_ref[pl.ds(r, chunk_rows), :].astype(jnp.float32)
            x = jnp.abs(a - b)
            if masked:
                rid = (row0 + r) + lax.broadcasted_iota(
                    jnp.int32, (chunk_rows, lanes), 0)
                x = jnp.where(rid < rows_valid, x, jnp.float32(0.0))
            return x.reshape(chunk_rows // 8, 8, lanes).sum(axis=0)

        return lax.fori_loop(
            0, n_chunks,
            lambda j, acc: acc + chunk_sum(j),
            jnp.zeros((8, lanes), jnp.float32),
            unroll=u)

    # Fast path: full interior tile -> no iota/compare/select on the VPU.
    @pl.when(row0 + tile_rows <= rows_valid)
    def _():
        acc_ref[...] += fold(masked=False)

    # Boundary path: partial tail tile OR clamped duplicate (row0 >= rows_valid).
    @pl.when(row0 + tile_rows > rows_valid)
    def _():
        acc_ref[...] += fold(masked=True)

    # Epilogue: fold the per-core (8, lanes) accumulator down to one scalar
    # inside the kernel (XLU slot is otherwise idle), so the wrapper never
    # launches a separate XLA reduce.
    @pl.when(i == n_i - 1)
    def _():
        s = jnp.sum(acc_ref[...], axis=0, keepdims=True)    # (1, lanes)
        o_ref[...] = jnp.sum(s, axis=1, keepdims=True)      # (1, 1)


def rec_loss(y_true, y_pred, *, tile_rows=8192, lanes=_LANES,
             chunk_rows=128, unroll=4):
    """Mean absolute error over all elements, computed in a Pallas TPU kernel."""
    assert y_true.shape == y_pred.shape
    assert y_true.dtype == y_pred.dtype
    n = y_true.size

    a = y_true.reshape(-1)
    b = y_pred.reshape(-1)

    # Only pad when the flat size is not a multiple of the lane width.  Padded
    # entries are zero in BOTH arrays -> |a-b| = 0, so no masking needed for them.
    pad = (-n) % lanes
    if pad:
        a = jnp.pad(a, (0, pad))
        b = jnp.pad(b, (0, pad))

    rows = a.size // lanes
    a2 = a.reshape(rows, lanes)
    b2 = b.reshape(rows, lanes)

    # Sublane multiple depends on dtype packing (f32 -> 8, bf16 -> 16, i8 -> 32).
    itemsize = jnp.dtype(a2.dtype).itemsize
    sub = 8 * max(1, 4 // itemsize)

    tr = min(_round_up(tile_rows, sub), _round_up(rows, sub))
    assert rows + tr < 2 ** 31, "int32 row ids in the kernel would overflow"

    # Sub-chunk: multiple of the sublane packing and an exact divisor of tr.
    ch = max(_round_up(min(chunk_rows, tr), sub), sub)
    ch = min(ch, tr)
    while tr % ch:
        ch -= sub

    num_tiles = pl.cdiv(rows, tr)
    # Leading "parallel" axis shards rows across the two TensorCores on v7x.
    # Skip it for tiny grids so single-core chips don't DMA a masked duplicate
    # tail tile for nothing.
    num_cores = 2 if num_tiles >= 4 else 1
    tiles_per_core = pl.cdiv(num_tiles, num_cores)
    grid = (num_cores, tiles_per_core)

    def in_map(c, i):
        # Clamp so the duplicated tail tile on the second core stays in bounds;
        # its contribution is zeroed by the in-kernel masked path.
        return (jnp.minimum(c * tiles_per_core + i, num_tiles - 1), 0)

    kernel = functools.partial(
        _mae_kernel,
        tile_rows=tr,
        lanes=lanes,
        rows_valid=rows,
        tiles_per_core=tiles_per_core,
        chunk_rows=ch,
        unroll=unroll,
    )

    bytes_in = 2 * rows * lanes * itemsize
    bytes_out = num_cores * 4

    partials = pl.pallas_call(
        kernel,
        out_shape=jax.ShapeDtypeStruct((num_cores, 1, 1), jnp.float32),
        grid_spec=pltpu.PrefetchScalarGridSpec(
            num_scalar_prefetch=0,
            grid=grid,
            in_specs=[
                pl.BlockSpec((tr, lanes), in_map),
                pl.BlockSpec((tr, lanes), in_map),
            ],
            # One f32 per core, written only in the epilogue; block dims equal
            # the full (1, 1) trailing array dims so the (8,128) rule is met.
            out_specs=pl.BlockSpec((None, 1, 1), lambda c, i: (c, 0, 0)),
            scratch_shapes=[pltpu.VMEM((8, lanes), jnp.float32)],
        ),
        compiler_params=pltpu.CompilerParams(
            dimension_semantics=("parallel", "arbitrary"),
            # 2 inputs x 2 buffers x 4 MiB (tr=8192 f32) = 16 MiB of pipeline
            # VMEM; 48 MiB scoped fits v7x's 64 MiB physical and overrides
            # v5e's 16 MiB default scoped limit.
            vmem_limit_bytes=48 * 1024 * 1024,
        ),
        cost_estimate=pl.CostEstimate(
            flops=2 * n, transcendentals=0,
            bytes_accessed=bytes_in + bytes_out,
        ),
    )(a2, b2)

    # Tiny final add of <=2 scalars + mean scaling.  (For n > 2^24 the f32
    # divide loses ~1e-7 relative precision; negligible for a mean.)
    return jnp.sum(partials) / n


if __name__ == "__main__":
    key = jax.random.PRNGKey(0)
    k1, k2 = jax.random.split(key)
    # Small NCHW-like shapes consistent with the module's usage.
    y_true = jax.random.normal(k1, (2, 4, 16, 16), dtype=jnp.float32)
    y_pred = jax.random.normal(k2, (2, 4, 16, 16), dtype=jnp.float32)

    loss = rec_loss(y_true, y_pred)
    jax.block_until_ready(loss)

    ref = jnp.mean(jnp.abs(y_true - y_pred))
    assert abs(float(loss) - float(ref)) < 1e-5, (float(loss), float(ref))
    print("KERNEL_OK")
</pallas_src>

<mosaic_0001>
module attributes {stable_mosaic.version = 11 : i64} {
  func.func @_mae_kernel(%arg0: i32, %arg1: i32, %arg2: memref<16x128xf32, #tpu.memory_space<vmem>>, %arg3: memref<16x128xf32, #tpu.memory_space<vmem>>, %arg4: memref<1x1x1xf32, #tpu.memory_space<vmem>>, %arg5: memref<8x128xf32, #tpu.memory_space<vmem>>) attributes {dimension_semantics = [#tpu.dimension_semantics<parallel>, #tpu.dimension_semantics<arbitrary>], iteration_bounds = array<i64: 1, 1>, scalar_prefetch = 0 : i64, scratch_operands = 1 : i64, tpu.core_type = #tpu.core_type<tc>, window_params = [{transform_indices = @transform_0, window_bounds = array<i64: 16, 128>}, {transform_indices = @transform_1, window_bounds = array<i64: 16, 128>}, {transform_indices = @transform_2, window_bounds = array<i64: 1, 1, 1>}]} {
    %c0_i32 = arith.constant 0 : i32
    %0 = arith.cmpi eq, %arg1, %c0_i32 : i32
    %1 = arith.extui %0 : i1 to i32
    %c0_i32_0 = arith.constant 0 : i32
    %2 = arith.cmpi ne, %1, %c0_i32_0 : i32
    scf.if %2 {
      %cst = arith.constant 0.000000e+00 : f32
      %17 = vector.broadcast %cst : f32 to vector<8x128xf32>
      %c0 = arith.constant 0 : index
      %c0_9 = arith.constant 0 : index
      %18 = vector.load %arg5[%c0, %c0_9] : memref<8x128xf32, #tpu.memory_space<vmem>>, vector<8x128xf32>
      tpu.vector_store %arg5[%c0, %c0_9], %17 {strides = array<i32>} : memref<8x128xf32, #tpu.memory_space<vmem>>, vector<8x128xf32>,
    } else {
    }
    %c1_i32 = arith.constant 1 : i32
    %3 = arith.muli %arg0, %c1_i32 : i32
    %4 = arith.addi %3, %arg1 : i32
    %c16_i32 = arith.constant 16 : i32
    %5 = arith.muli %4, %c16_i32 : i32
    %c16_i32_1 = arith.constant 16 : i32
    %6 = arith.addi %5, %c16_i32_1 : i32
    %c16_i32_2 = arith.constant 16 : i32
    %7 = arith.cmpi sle, %6, %c16_i32_2 : i32
    %8 = arith.extui %7 : i1 to i32
    %c0_i32_3 = arith.constant 0 : i32
    %9 = arith.cmpi ne, %8, %c0_i32_3 : i32
    scf.if %9 {
      %c0 = arith.constant 0 : index
      %c0_9 = arith.constant 0 : index
      %17 = vector.load %arg5[%c0, %c0_9] : memref<8x128xf32, #tpu.memory_space<vmem>>, vector<8x128xf32>
      %cst = arith.constant 0.000000e+00 : f32
      %18 = vector.broadcast %cst : f32 to vector<8x128xf32>
      %c0_i32_10 = arith.constant 0 : i32
      %c16_i32_11 = arith.constant 16 : i32
      %19 = arith.muli %c0_i32_10, %c16_i32_11 : i32
      %20 = tpu.assume_multiple %19, 16 : i32
      %21 = arith.index_cast %20 : i32 to index
      %c0_12 = arith.constant 0 : index
      %22 = vector.load %arg2[%21, %c0_12] : memref<16x128xf32, #tpu.memory_space<vmem>>, vector<16x128xf32>
      %23 = arith.index_cast %20 : i32 to index
      %c0_13 = arith.constant 0 : index
      %24 = vector.load %arg3[%23, %c0_13] : memref<16x128xf32, #tpu.memory_space<vmem>>, vector<16x128xf32>
      %25 = arith.subf %22, %24 : vector<16x128xf32>
      %26 = math.absf %25 : vector<16x128xf32>
      %27 = vector.shape_cast %26 : vector<16x128xf32> to vector<2x8x128xf32>
      %cst_14 = arith.constant dense<0.000000e+00> : vector<8x128xf32>
      %28 = vector.multi_reduction <add>, %27, %cst_14 [0] : vector<2x8x128xf32> to vector<8x128xf32>
      %29 = arith.addf %18, %28 : vector<8x128xf32>
      %c1_i32_15 = arith.constant 1 : i32
      %30 = arith.addf %17, %29 : vector<8x128xf32>
      %c0_16 = arith.constant 0 : index
      %c0_17 = arith.constant 0 : index
      %31 = vector.load %arg5[%c0_16, %c0_17] : memref<8x128xf32, #tpu.memory_space<vmem>>, vector<8x128xf32>
      tpu.vector_store %arg5[%c0_16, %c0_17], %30 {strides = array<i32>} : memref<8x128xf32, #tpu.memory_space<vmem>>, vector<8x128xf32>,
    } else {
    }
    %c16_i32_4 = arith.constant 16 : i32
    %10 = arith.addi %5, %c16_i32_4 : i32
    %c16_i32_5 = arith.constant 16 : i32
    %11 = arith.cmpi sgt, %10, %c16_i32_5 : i32
    %12 = arith.extui %11 : i1 to i32
    %c0_i32_6 = arith.constant 0 : i32
    %13 = arith.cmpi ne, %12, %c0_i32_6 : i32
    scf.if %13 {
      %c0 = arith.constant 0 : index
      %c0_9 = arith.constant 0 : index
      %17 = vector.load %arg5[%c0, %c0_9] : memref<8x128xf32, #tpu.memory_space<vmem>>, vector<8x128xf32>
      %cst = arith.constant 0.000000e+00 : f32
      %18 = vector.broadcast %cst : f32 to vector<8x128xf32>
      %c0_i32_10 = arith.constant 0 : i32
      %c16_i32_11 = arith.constant 16 : i32
      %19 = arith.muli %c0_i32_10, %c16_i32_11 : i32
      %20 = tpu.assume_multiple %19, 16 : i32
      %21 = arith.index_cast %20 : i32 to index
      %c0_12 = arith.constant 0 : index
      %22 = vector.load %arg2[%21, %c0_12] : memref<16x128xf32, #tpu.memory_space<vmem>>, vector<16x128xf32>
      %23 = arith.index_cast %20 : i32 to index
      %c0_13 = arith.constant 0 : index
      %24 = vector.load %arg3[%23, %c0_13] : memref<16x128xf32, #tpu.memory_space<vmem>>, vector<16x128xf32>
      %25 = arith.subf %22, %24 : vector<16x128xf32>
      %26 = math.absf %25 : vector<16x128xf32>
      %27 = arith.addi %5, %20 : i32
      %28 = tpu.iota {dimensions = array<i32: 0>} : vector<16x128xi32>
      %29 = vector.broadcast %27 : i32 to vector<16x128xi32>
      %30 = arith.addi %29, %28 : vector<16x128xi32>
      %c16_i32_14 = arith.constant 16 : i32
      %31 = vector.broadcast %c16_i32_14 : i32 to vector<16x128xi32>
      %32 = arith.cmpi slt, %30, %31 : vector<16x128xi32>
      %cst_15 = arith.constant 0.000000e+00 : f32
      %33 = vector.broadcast %cst_15 : f32 to vector<16x128xf32>
      %34 = arith.select %32, %26, %33 : vector<16x128xi1>, vector<16x128xf32>
      %35 = vector.shape_cast %34 : vector<16x128xf32> to vector<2x8x128xf32>
      %cst_16 = arith.constant dense<0.000000e+00> : vector<8x128xf32>
      %36 = vector.multi_reduction <add>, %35, %cst_16 [0] : vector<2x8x128xf32> to vector<8x128xf32>
      %37 = arith.addf %18, %36 : vector<8x128xf32>
      %c1_i32_17 = arith.constant 1 : i32
      %38 = arith.addf %17, %37 : vector<8x128xf32>
      %c0_18 = arith.constant 0 : index
      %c0_19 = arith.constant 0 : index
      %39 = vector.load %arg5[%c0_18, %c0_19] : memref<8x128xf32, #tpu.memory_space<vmem>>, vector<8x128xf32>
      tpu.vector_store %arg5[%c0_18, %c0_19], %38 {strides = array<i32>} : memref<8x128xf32, #tpu.memory_space<vmem>>, vector<8x128xf32>,
    } else {
    }
    %c0_i32_7 = arith.constant 0 : i32
    %14 = arith.cmpi eq, %arg1, %c0_i32_7 : i32
    %15 = arith.extui %14 : i1 to i32
    %c0_i32_8 = arith.constant 0 : i32
    %16 = arith.cmpi ne, %15, %c0_i32_8 : i32
    scf.if %16 {
      %c0 = arith.constant 0 : index
      %c0_9 = arith.constant 0 : index
      %17 = vector.load %arg5[%c0, %c0_9] : memref<8x128xf32, #tpu.memory_space<vmem>>, vector<8x128xf32>
      %cst = arith.constant dense<0.000000e+00> : vector<128xf32>
      %18 = vector.multi_reduction <add>, %17, %cst [0] : vector<8x128xf32> to vector<128xf32>
      %19 = vector.shape_cast %18 : vector<128xf32> to vector<1x128xf32>
      %cst_10 = arith.constant dense<0.000000e+00> : vector<1xf32>
      %20 = vector.multi_reduction <add>, %19, %cst_10 [1] : vector<1x128xf32> to vector<1xf32>
      %21 = vector.shape_cast %20 : vector<1xf32> to vector<1x1xf32>
      %c0_11 = arith.constant 0 : index
      %c0_12 = arith.constant 0 : index
      %c0_13 = arith.constant 0 : index
      %22 = vector.load %arg4[%c0_11, %c0_12, %c0_13] : memref<1x1x1xf32, #tpu.memory_space<vmem>>, vector<1x1x1xf32>
      %23 = vector.shape_cast %22 : vector<1x1x1xf32> to vector<1x1xf32>
      %24 = vector.shape_cast %21 : vector<1x1xf32> to vector<1x1x1xf32>
      tpu.vector_store %arg4[%c0_11, %c0_12, %c0_13], %24 {strides = array<i32>} : memref<1x1x1xf32, #tpu.memory_space<vmem>>, vector<1x1x1xf32>,
    } else {
    }
    return
  }
  func.func @transform_0(%arg0: i32, %arg1: i32) -> (i32, i32) {
    %c1_i32 = arith.constant 1 : i32
    %0 = arith.muli %arg0, %c1_i32 : i32
    %1 = arith.addi %0, %arg1 : i32
    %c0_i32 = arith.constant 0 : i32
    %2 = arith.minsi %1, %c0_i32 : i32
    %c0_i32_0 = arith.constant 0 : i32
    %c0_i32_1 = arith.constant 0 : i32
    return %2, %c0_i32_0 : i32, i32
  }
  func.func @transform_1(%arg0: i32, %arg1: i32) -> (i32, i32) {
    %c1_i32 = arith.constant 1 : i32
    %0 = arith.muli %arg0, %c1_i32 : i32
    %1 = arith.addi %0, %arg1 : i32
    %c0_i32 = arith.constant 0 : i32
    %2 = arith.minsi %1, %c0_i32 : i32
    %c0_i32_0 = arith.constant 0 : i32
    %c0_i32_1 = arith.constant 0 : i32
    return %2, %c0_i32_0 : i32, i32
  }
  func.func @transform_2(%arg0: i32, %arg1: i32) -> (i32, i32, i32) {
    %c0_i32 = arith.constant 0 : i32
    %c0_i32_0 = arith.constant 0 : i32
    %c0_i32_1 = arith.constant 0 : i32
    return %arg0, %c0_i32, %c0_i32_0 : i32, i32, i32
  }
}

</mosaic_0001>

<llo_original>
// kernel: tpu_custom_call.1
$region0: #{tpu_custom_call.1}
  #allocation0 [shape = 'u32[]', space=smem, size = 0x4, offset = 0x4, fixed_abs, tag = 'smem constant byte address 0x4 - core index']
  #allocation1 [shape = 'u32[144,128]{1,0:T(1,128)}', space=vmem, size = 0x12000, scoped, tag = 'internal scratch']
  #allocation2 [shape = 'f32[8,128]{1,0:T(8,128)}', space=vmem, size = 0x1000, scoped, tag = 'scratch operand']
  %s0 = inlined_call_operand.hbm [shape: f32[16,128], index: 0, kind: input, shape index: {}]
  %s1 = inlined_call_operand.hbm [shape: f32[16,128], index: 1, kind: input, shape index: {}]
  %s2 = inlined_call_operand.hbm [shape: f32[1,1,1], index: 2, kind: output, shape index: {}]
  %s3 = sld [smem:[#allocation0]]
  $region42: #{tpu_custom_call.1} parent=0
    _
  %s5 = ssub.s32 1, %s3
  %s6 = scalar_select 0, %s5, %s3
  $region1: #{tpu_custom_call.1} parent=0
    #allocation3 [shape = 'u8[8192]{0}', space=vmem, size = 0x2000, scoped, tag = 'input window, operand 0, single buffered']
    #allocation4 [shape = 's32[1]{0}', space=sflag, size = 0x4, scoped, tag = 'scoped memory for tpu_custom_call.1']
    #allocation5 [shape = 's32[1]{0}', space=sflag, size = 0x4, scoped, tag = 'scoped memory for tpu_custom_call.1']
    #allocation6 [shape = 'u8[8192]{0}', space=vmem, size = 0x2000, scoped, tag = 'input window, operand 1, single buffered']
    #allocation7 [shape = 's32[1]{0}', space=sflag, size = 0x4, scoped, tag = 'scoped memory for tpu_custom_call.1']
    #allocation8 [shape = 'u8[512]{0}', space=vmem, size = 0x400, scoped, tag = 'output window, operand 0, single buffered']
    %7 = vsyncpa [#allocation4], 0
    %8 = vsyncpa [#allocation7], 0
    %9 = vsyncpa [#allocation5], 0
    // Predicated region
    $region2: #{tpu_custom_call.1} parent=1 // pred_check
      _
    $region3: #{tpu_custom_call.1} parent=1 // pred_check_branch
      %11 = sbr.rel (0) target = $region5
    $region4: #{tpu_custom_call.1} parent=1 // pred_region
      %s12 = sadd.s32 0, 0
      %p13 = scmp.lt.s32.totalorder %s12, 0
      %s14 = scalar_select %p13, %s12, 0
      %s15 = smul.u32 2, %s14
      %s17 = ssub.s32 256, 256
      %18 = vsyncadd [#allocation4], %s17
      %s19 = smul.addr %s15, 128
      %s20 = scalar_lea.hbm %s0, %s19
      %s21 = sshll.u32 [#allocation3], 4
      %s22 = int_to_ptr.vmem [resolvable:$true] %s21
      %27 = dma.hbm_to_vmem [thread:$0]  %s20, 256, %s22, [#allocation4], 128, 128, 8
    $region5: #{tpu_custom_call.1} parent=1 // pred_fallthru
      _
    // Predicated region
    $region6: #{tpu_custom_call.1} parent=1 // pred_check
      _
    $region7: #{tpu_custom_call.1} parent=1 // pred_check_branch
      %29 = sbr.rel (0) target = $region9
    $region8: #{tpu_custom_call.1} parent=1 // pred_region
      %s30 = sadd.s32 0, 0
      %p31 = scmp.lt.s32.totalorder %s30, 0
      %s32 = scalar_select %p31, %s30, 0
      %s33 = smul.u32 2, %s32
      %s35 = ssub.s32 256, 256
      %36 = vsyncadd [#allocation7], %s35
      %s37 = smul.addr %s33, 128
      %s38 = scalar_lea.hbm %s1, %s37
      %s39 = sshll.u32 [#allocation6], 4
      %s40 = int_to_ptr.vmem [resolvable:$true] %s39
      %45 = dma.hbm_to_vmem [thread:$0]  %s38, 256, %s40, [#allocation7], 128, 128, 8
    $region9: #{tpu_custom_call.1} parent=1 // pred_fallthru
      _
    // Predicated region
    $region10: #{tpu_custom_call.1} parent=1 // pred_check
      _
    $region11: #{tpu_custom_call.1} parent=1 // pred_check_branch
      %47 = sbr.rel (0) target = $region13
    $region12: #{tpu_custom_call.1} parent=1 // pred_region
      %48 = dma.done [#allocation4], 256
    $region13: #{tpu_custom_call.1} parent=1 // pred_fallthru
      _
    // Predicated region
    $region14: #{tpu_custom_call.1} parent=1 // pred_check
      _
    $region15: #{tpu_custom_call.1} parent=1 // pred_check_branch
      %50 = sbr.rel (0) target = $region17
    $region16: #{tpu_custom_call.1} parent=1 // pred_region
      %51 = dma.done [#allocation7], 256
    $region17: #{tpu_custom_call.1} parent=1 // pred_fallthru
      _
    %s52 = sadd.s32 0, 0
    %p53 = scmp.lt.s32.totalorder %s52, 0
    %s54 = scalar_select %p53, %s52, 0
    %s55 = smul.u32 2, %s54
    %s56 = sadd.s32 0, 0
    %p57 = scmp.lt.s32.totalorder %s56, 0
    %s58 = scalar_select %p57, %s56, 0
    %s59 = smul.u32 2, %s58
    %p60 = scmp.eq.s32.totalorder 0, 0
    // Predicated region
    $region18: #{tpu_custom_call.1} parent=1 // pred_check
      %p61 = pneg %p60
    $region19: #{tpu_custom_call.1} parent=1 // pred_check_branch
      %63 = sbr.rel (%p61) target = $region21
    $region20: #{tpu_custom_call.1} parent=1 // pred_region
      %64 = vst [vmem:[#allocation2] sm:$0xff] 0.0
    $region21: #{tpu_custom_call.1} parent=1 // pred_fallthru
      _
    %s65 = sadd.s32 0, 0
    %s66 = smul.u32 %s65, 16
    %s67 = sadd.s32 %s66, 16
    %p68 = scmp.le.s32.totalorder %s67, 16
    // Predicated region
    $region22: #{tpu_custom_call.1} parent=1 // pred_check
      %p69 = pneg %p68
    $region23: #{tpu_custom_call.1} parent=1 // pred_check_branch
      %71 = sbr.rel (%p69) target = $region25
    $region24: #{tpu_custom_call.1} parent=1 // pred_region
      %v72 = vld [vmem:[#allocation2] sm:$0xff]
      %v73 = vld [vmem:[#allocation3] sm:$0xff]
      %v74 = vld [vmem:[#allocation3 + $0x8] sm:$0xff]
      %v75 = vld [vmem:[#allocation6] sm:$0xff]
      %v76 = vld [vmem:[#allocation6 + $0x8] sm:$0xff]
      %v77 = vsub.f32 %v73, %v75
      %v78 = vsub.f32 %v74, %v76
      %v79 = vand.u32 2147483647, %v77
      %v80 = vand.u32 2147483647, %v78
      %v81 = vadd.f32 %v79, %v80
      %v82 = vadd.f32 %v81, 0.0
      %v83 = vadd.f32 %v72, %v82
      %84 = vst [vmem:[#allocation2] sm:$0xff] %v83
    $region25: #{tpu_custom_call.1} parent=1 // pred_fallthru
      _
    %p85 = scmp.gt.s32.totalorder %s67, 16
    // Predicated region
    $region26: #{tpu_custom_call.1} parent=1 // pred_check
      %p86 = pneg %p85
    $region27: #{tpu_custom_call.1} parent=1 // pred_check_branch
      %88 = sbr.rel (%p86) target = $region29
    $region28: #{tpu_custom_call.1} parent=1 // pred_region
      %v89 = vld [vmem:[#allocation2] sm:$0xff]
      %v90 = vld [vmem:[#allocation3] sm:$0xff]
      %v91 = vld [vmem:[#allocation3 + $0x8] sm:$0xff]
      %v92 = vld [vmem:[#allocation6] sm:$0xff]
      %v93 = vld [vmem:[#allocation6 + $0x8] sm:$0xff]
      %v94 = vsub.f32 %v90, %v92
      %v95 = vsub.f32 %v91, %v93
      %v96 = vand.u32 2147483647, %v94
      %v97 = vand.u32 2147483647, %v95
      %s98 = sadd.s32 %s66, 0
      %v99 = vlaneseq
      %v100 = vshrl.u32 %v99, 7
      %v101 = vadd.s32 %v100, 8
      %v102 = vstv %s98
      %v103 = vadd.s32 %v102, %v100
      %v104 = vadd.s32 %v102, %v101
      %vm105 = vcmp.lt.s32.totalorder %v103, 16
      %vm106 = vcmp.lt.s32.totalorder %v104, 16
      %v107 = vsel %vm105, %v96, 0.0
      %v108 = vsel %vm106, %v97, 0.0
      %v109 = vadd.f32 %v107, %v108
      %v110 = vadd.f32 %v109, 0.0
      %v111 = vadd.f32 %v89, %v110
      %112 = vst [vmem:[#allocation2] sm:$0xff] %v111
    $region29: #{tpu_custom_call.1} parent=1 // pred_fallthru
      _
    // Predicated region
    $region30: #{tpu_custom_call.1} parent=1 // pred_check
      %p113 = pneg %p60
    $region31: #{tpu_custom_call.1} parent=1 // pred_check_branch
      %115 = sbr.rel (%p113) target = $region33
    $region32: #{tpu_custom_call.1} parent=1 // pred_region
      %v116 = vld [vmem:[#allocation2] sm:$0xff]
      %v117 = vrot.slane %v116, 4
      %v118 = vadd.f32 %v116, %v117
      %v119 = vrot.slane %v118, 2
      %v120 = vadd.f32 %v118, %v119
      %v121 = vrot.slane %v120, 1
      %v122 = vadd.f32 %v120, %v121
      %123 = vadd.xlane.f32.xlu0 %v122
      %v124 = vpop.xlane.xlu0 %123
      %vm125 = vcmask 0
      %126 = vst.msk [vmem:[#allocation8] sm:$0x1] %vm125, %v124
    $region33: #{tpu_custom_call.1} parent=1 // pred_fallthru
      _
    // Predicated region
    $region34: #{tpu_custom_call.1} parent=1 // pred_check
      _
    $region35: #{tpu_custom_call.1} parent=1 // pred_check_branch
      %128 = sbr.rel (0) target = $region37
    $region36: #{tpu_custom_call.1} parent=1 // pred_region
      %s130 = ssub.s32 16, 16
      %131 = vsyncadd [#allocation5], %s130
      %s133 = sshll.u32 [#allocation8], 4
      %s134 = int_to_ptr.vmem [resolvable:$true] %s133
      %136 = dma.vmem_to_hbm [thread:$0]  %s134, 16, %s2, [#allocation5]
    $region37: #{tpu_custom_call.1} parent=1 // pred_fallthru
      _
    // Predicated region
    $region38: #{tpu_custom_call.1} parent=1 // pred_check
      _
    $region39: #{tpu_custom_call.1} parent=1 // pred_check_branch
      %138 = sbr.rel (0) target = $region41
    $region40: #{tpu_custom_call.1} parent=1 // pred_region
      %139 = dma.done [#allocation5], 16
    $region41: #{tpu_custom_call.1} parent=1 // pred_fallthru
      _
    %140 = vsyncpa [#allocation4], 1
    %141 = vsyncpa [#allocation7], 1
    %142 = vsyncpa [#allocation5], 1

</llo_original>
